<compile_context>
chip_gen: v6e
topology: v6e:2x2x1
jax: 0.10.0
libtpu: 0.0.40
codegen_flags: <defaults>
</compile_context>

<pallas_src>
import functools
import math

import jax
import jax.numpy as jnp
from jax.experimental import pallas as pl
from jax.experimental.pallas import tpu as pltpu

_NEG = -1e30          # large finite negative instead of -inf (avoids inf-inf NaN hazards)
_LN_EPS = 1e-5        # torch.nn.LayerNorm default
_GELU_C = 0.7978845608028654  # sqrt(2/pi)


# ----------------------------- tiling / vmem helpers ----------------------------

def _row_tile(n, cap=256):
    """Sublane (second-to-last dim) tile: multiple of 8 that divides n, else full dim."""
    for t in (512, 256, 128, 64, 32, 16, 8):
        if t <= cap and n % t == 0:
            return t
    return n


def _lane_tile(n, cap=512):
    """Lane (last dim) tile: multiple of 128 that divides n, else full dim."""
    for t in (512, 256, 128):
        if t <= cap and n % t == 0:
            return t
    return n


def _vmem_limit(frac=0.7, default=48 * 1024 * 1024):
    """~70% of physical VMEM, re-derived per generation (v5e/v6e 128 MiB, v7x 64 MiB)."""
    try:
        cap = getattr(pltpu.get_tpu_info(), "vmem_capacity_bytes", None)
        if cap:
            return int(cap * frac)
    except Exception:
        pass
    return default


# ----------------------------- kernel 1: LN1 + QKV ------------------------------

def _ln_qkv_kernel(q_scale, x_ref, g_ref, b_ref, wq_ref, wk_ref, wv_ref,
                   q_ref, k_ref, v_ref):
    x = x_ref[...].astype(jnp.float32)
    mean = jnp.mean(x, axis=-1, keepdims=True)
    var = jnp.mean(jnp.square(x - mean), axis=-1, keepdims=True)
    h = (x - mean) * jax.lax.rsqrt(var + _LN_EPS)
    h = (h * g_ref[...] + b_ref[...]).astype(jnp.bfloat16)          # bf16 into the MXU
    q = jnp.dot(h, wq_ref[...], preferred_element_type=jnp.float32)
    q_ref[...] = (q * q_scale).astype(q_ref.dtype)                  # fold 1/sqrt(hd) into q
    k_ref[...] = jnp.dot(h, wk_ref[...], preferred_element_type=jnp.float32).astype(k_ref.dtype)
    v_ref[...] = jnp.dot(h, wv_ref[...], preferred_element_type=jnp.float32).astype(v_ref.dtype)


def fused_ln_qkv(x2d, gamma, beta, wq, wk, wv, q_scale):
    """LayerNorm fused with the QKV projection. Returns q, k, v, each (N, d) bf16."""
    N, D = x2d.shape
    tm = _row_tile(N, cap=256)
    tn = _lane_tile(D)          # column-tile the weights -> bounded weight VMEM on v7x
    g = gamma.reshape(1, D)
    b = beta.reshape(1, D)
    row_spec = pl.BlockSpec((tm, D), lambda i, j: (i, 0))
    vec_spec = pl.BlockSpec((1, D), lambda i, j: (0, 0))
    w_spec = pl.BlockSpec((D, tn), lambda i, j: (0, j))
    out_spec = pl.BlockSpec((tm, tn), lambda i, j: (i, j))
    out = jax.ShapeDtypeStruct((N, D), jnp.bfloat16)
    return pl.pallas_call(
        functools.partial(_ln_qkv_kernel, q_scale),
        out_shape=(out, out, out),
        grid=(N // tm, D // tn),
        in_specs=[row_spec, vec_spec, vec_spec, w_spec, w_spec, w_spec],
        out_specs=[out_spec, out_spec, out_spec],
        compiler_params=pltpu.CompilerParams(
            dimension_semantics=("parallel", "parallel")),
    )(x2d, g, b, wq, wk, wv)


# ------------------------- kernel 2: flash causal attention ---------------------

def _flash_attn_kernel(q_ref, k_ref, v_ref, o_ref, m_sc, l_sc, acc_sc):
    tq, D = acc_sc.shape
    H = m_sc.shape[-1]
    hd = D // H
    tk = k_ref.shape[1]
    qi = pl.program_id(1)
    ki = pl.program_id(2)

    @pl.when(ki == 0)
    def _init():
        m_sc[...] = jnp.full_like(m_sc, _NEG)
        l_sc[...] = jnp.zeros_like(l_sc)
        acc_sc[...] = jnp.zeros_like(acc_sc)

    def _update(use_mask):
        q = q_ref[0]        # (tq, D) bf16, heads packed along lanes; 1/sqrt(hd) pre-folded
        k = k_ref[0]
        v = v_ref[0]
        if use_mask:
            rows = qi * tq + jax.lax.broadcasted_iota(jnp.int32, (tq, tk), 0)
            cols = ki * tk + jax.lax.broadcasted_iota(jnp.int32, (tq, tk), 1)
            causal = cols <= rows
        # TODO(synk): per-head contraction width is hd (<128) which underfills the MXU;
        # accepted to keep heads packed lane-dense (folding heads into the grid would
        # require a head-split layout and extra transposes).
        for h in range(H):
            sl = slice(h * hd, (h + 1) * hd)
            hh = slice(h, h + 1)
            s = jax.lax.dot_general(q[:, sl], k[:, sl], (((1,), (1,)), ((), ())),
                                    preferred_element_type=jnp.float32)
            if use_mask:
                s = jnp.where(causal, s, _NEG)
            m_prev = m_sc[:, hh]                                             # (tq, 1)
            m_new = jnp.maximum(m_prev, jnp.max(s, axis=-1, keepdims=True))
            # masked scores underflow to exactly 0 in exp (block ki==0 always gives every
            # row a finite max), so no extra mask multiply is needed.
            p = jnp.exp(s - m_new)
            alpha = jnp.exp(m_prev - m_new)
            l_sc[:, hh] = alpha * l_sc[:, hh] + jnp.sum(p, axis=-1, keepdims=True)
            acc_sc[:, sl] = alpha * acc_sc[:, sl] + jnp.dot(
                p.astype(v.dtype), v[:, sl], preferred_element_type=jnp.float32)
            m_sc[:, hh] = m_new

    below_diag = (ki + 1) * tk <= qi * tq          # fully unmasked kv block -> no mask built
    on_diag = jnp.logical_and(ki * tk < (qi + 1) * tq, jnp.logical_not(below_diag))

    @pl.when(below_diag)
    def _full():
        _update(use_mask=False)

    @pl.when(on_diag)
    def _masked():
        _update(use_mask=True)

    @pl.when(ki == pl.num_programs(2) - 1)
    def _finalize():
        # approx reciprocal introduces ~1e-3 relative error in the softmax normalization
        inv = pl.reciprocal(l_sc[...], approx=True)                   # (tq, H)
        inv_full = jnp.concatenate(
            [jnp.broadcast_to(inv[:, h:h + 1], (tq, hd)) for h in range(H)], axis=-1)
        o_ref[0] = (acc_sc[...] * inv_full).astype(o_ref.dtype)       # one lane-dense store


def pallas_flash_attention(q, k, v, n_head):
    """q, k, v: (B, T, d) bf16 with heads packed along the feature axis -> (B, T, d) bf16."""
    B, T, D = q.shape
    tq = _row_tile(T, cap=256)
    tk = _row_tile(T, cap=256)
    nq, nk = T // tq, T // tk

    def kv_index(b, qi, ki):
        # Clamp to the last causally-needed kv block: fully-masked blocks repeat the
        # previous block index, so the pipeline skips their HBM->VMEM DMA entirely.
        return (b, jnp.minimum(ki, ((qi + 1) * tq - 1) // tk), 0)

    q_spec = pl.BlockSpec((1, tq, D), lambda b, qi, ki: (b, qi, 0))
    kv_spec = pl.BlockSpec((1, tk, D), kv_index)
    o_spec = pl.BlockSpec((1, tq, D), lambda b, qi, ki: (b, qi, 0))
    bytes_el = 2  # bf16
    kv_bytes = 2 * B * D * bytes_el * sum(min(T, (i + 1) * tq) for i in range(nq))
    return pl.pallas_call(
        _flash_attn_kernel,
        out_shape=jax.ShapeDtypeStruct((B, T, D), jnp.bfloat16),
        grid=(B, nq, nk),
        in_specs=[q_spec, kv_spec, kv_spec],
        out_specs=o_spec,
        scratch_shapes=[pltpu.VMEM((tq, n_head), jnp.float32),   # running max (lane-packed)
                        pltpu.VMEM((tq, n_head), jnp.float32),   # running sum (lane-packed)
                        pltpu.VMEM((tq, D), jnp.float32)],       # lane-dense accumulator
        compiler_params=pltpu.CompilerParams(
            dimension_semantics=("parallel", "parallel", "arbitrary"),
            vmem_limit_bytes=_vmem_limit()),
        cost_estimate=pl.CostEstimate(
            flops=2 * B * T * T * D,                         # causal ~ half of dense 4BTTD
            transcendentals=B * n_head * T * T // 2,
            bytes_accessed=2 * B * T * D * bytes_el + kv_bytes),
    )(q, k, v)


# --------------------- kernel 3: tiled matmul + fused residual ------------------

def _matmul_resid_kernel(a_ref, w_ref, r_ref, o_ref, acc_ref):
    @pl.when(pl.program_id(2) == 0)
    def _init():
        acc_ref[...] = jnp.zeros_like(acc_ref)

    acc_ref[...] += jnp.dot(a_ref[...], w_ref[...], preferred_element_type=jnp.float32)

    @pl.when(pl.program_id(2) == pl.num_programs(2) - 1)
    def _finalize():
        o_ref[...] = (acc_ref[...] + r_ref[...].astype(jnp.float32)).astype(o_ref.dtype)


def fused_matmul_residual(a, w, resid):
    """resid + a @ w : bf16 operands, f32 accumulator, residual fused in the epilogue."""
    M, K = a.shape
    K2, No = w.shape
    assert K == K2 and resid.shape == (M, No)
    tm, tn, tk = _row_tile(M, cap=512), _lane_tile(No), _lane_tile(K)
    return pl.pallas_call(
        _matmul_resid_kernel,
        out_shape=jax.ShapeDtypeStruct((M, No), jnp.float32),
        grid=(M // tm, No // tn, K // tk),
        in_specs=[pl.BlockSpec((tm, tk), lambda i, j, kk: (i, kk)),
                  pl.BlockSpec((tk, tn), lambda i, j, kk: (kk, j)),
                  pl.BlockSpec((tm, tn), lambda i, j, kk: (i, j))],
        out_specs=pl.BlockSpec((tm, tn), lambda i, j, kk: (i, j)),
        scratch_shapes=[pltpu.VMEM((tm, tn), jnp.float32)],
        compiler_params=pltpu.CompilerParams(
            dimension_semantics=("parallel", "parallel", "arbitrary")),
    )(a, w, resid)


# ------------------------ kernel 4: LN2 + router logits --------------------------

def _ln_router_kernel(x_ref, g_ref, b_ref, wg_ref, wn_ref, h_ref, lg_ref, ln_ref):
    x = x_ref[...].astype(jnp.float32)
    mean = jnp.mean(x, axis=-1, keepdims=True)
    var = jnp.mean(jnp.square(x - mean), axis=-1, keepdims=True)
    h = (x - mean) * jax.lax.rsqrt(var + _LN_EPS)
    h = h * g_ref[...] + b_ref[...]
    h_ref[...] = h.astype(h_ref.dtype)
    hb = h.astype(jnp.bfloat16)
    lg_ref[...] = jnp.dot(hb, wg_ref[...], preferred_element_type=jnp.float32).astype(lg_ref.dtype)
    ln_ref[...] = jnp.dot(hb, wn_ref[...], preferred_element_type=jnp.float32).astype(ln_ref.dtype)


def fused_ln_router(x2d, gamma, beta, w_g, w_noise):
    """LayerNorm2 fused with both router matmuls: returns (h2, gate_logits, noise_logits)."""
    N, D = x2d.shape
    E = w_g.shape[1]
    tm = _row_tile(N, cap=256)
    g = gamma.reshape(1, D)
    b = beta.reshape(1, D)
    row_spec = pl.BlockSpec((tm, D), lambda i: (i, 0))
    vec_spec = pl.BlockSpec((1, D), lambda i: (0, 0))
    w_spec = pl.BlockSpec((D, E), lambda i: (0, 0))
    logit_spec = pl.BlockSpec((tm, E), lambda i: (i, 0))
    # h2 is kept f32 in HBM so the per-row DMA gather in kernel 5 works on unpacked rows.
    return pl.pallas_call(
        _ln_router_kernel,
        out_shape=(jax.ShapeDtypeStruct((N, D), jnp.float32),
                   jax.ShapeDtypeStruct((N, E), jnp.float32),
                   jax.ShapeDtypeStruct((N, E), jnp.float32)),
        grid=(N // tm,),
        in_specs=[row_spec, vec_spec, vec_spec, w_spec, w_spec],
        out_specs=[row_spec, logit_spec, logit_spec],
        compiler_params=pltpu.CompilerParams(dimension_semantics=("parallel",)),
    )(x2d, g, b, w_g, w_noise)


# ---------------- kernel 5: expert MLPs with DMA-gather dispatch -----------------

def _expert_mlp_kernel(idx_ref, h2_hbm, w1_ref, w2_ref, o_ref, xb, sems):
    e = pl.program_id(0)
    j = pl.program_id(1)
    cap_pad = xb.shape[0]

    @pl.when(j == 0)
    def _gather_and_init():
        o_ref[...] = jnp.zeros_like(o_ref)
        # scalar-prefetch gather: DMA only the rows routed to expert `e` (HBM -> VMEM).
        # Per-expert gather is kept local to this grid step so the expert axis stays
        # megacore-"parallel" (cross-expert prefetch would require "arbitrary").
        copies = [pltpu.make_async_copy(h2_hbm.at[pl.ds(idx_ref[e, c], 1)],
                                        xb.at[pl.ds(c, 1)],
                                        sems.at[c])
                  for c in range(cap_pad)]
        for cp in copies:
            cp.start()
        for cp in copies:          # wait on the SAME descriptors that were started
            cp.wait()

    x = xb[...].astype(jnp.bfloat16)                                   # bf16 into the MXU
    hmid = jnp.dot(x, w1_ref[0], preferred_element_type=jnp.float32)   # (cap_pad, hk)
    # tanh-approx GELU: tanh maps onto the EUP slot instead of a VALU erf polynomial.
    hmid = 0.5 * hmid * (1.0 + jnp.tanh(_GELU_C * (hmid + 0.044715 * hmid * hmid * hmid)))
    # accumulate directly into the resident output block (no extra scratch copy)
    o_ref[0] = o_ref[0] + jnp.dot(hmid.astype(jnp.bfloat16), w2_ref[0],
                                  preferred_element_type=jnp.float32)


def pallas_expert_mlp(h2, token_idx, w1, w2):
    """Per-expert gather + two-layer GELU MLP.

    h2:        (N, d) f32        token activations (stay in HBM, gathered in-kernel)
    token_idx: (E, cap_pad)      token row indices per expert slot (int32)
    w1:        (E, d, 4d) bf16,  w2: (E, 4d, d) bf16
    returns    (E, cap_pad, d)   expert output per slot (f32)
    """
    N, D = h2.shape
    E, cap_pad = token_idx.shape
    D4 = w1.shape[-1]
    hk = _lane_tile(D4)          # K-tile of the hidden dim -> bounded weight VMEM (v7x)
    J = D4 // hk
    return pl.pallas_call(
        _expert_mlp_kernel,
        out_shape=jax.ShapeDtypeStruct((E, cap_pad, D), jnp.float32),
        grid_spec=pltpu.PrefetchScalarGridSpec(
            num_scalar_prefetch=1,
            grid=(E, J),
            in_specs=[pl.BlockSpec(memory_space=pl.ANY),                # h2, no auto-DMA
                      pl.BlockSpec((1, D, hk), lambda e, j, idx: (e, 0, j)),
                      pl.BlockSpec((1, hk, D), lambda e, j, idx: (e, j, 0))],
            out_specs=pl.BlockSpec((1, cap_pad, D), lambda e, j, idx: (e, 0, 0)),
            scratch_shapes=[pltpu.VMEM((cap_pad, D), jnp.float32),      # gathered tokens
                            pltpu.SemaphoreType.DMA((cap_pad,))]),
        compiler_params=pltpu.CompilerParams(
            dimension_semantics=("parallel", "arbitrary"),
            vmem_limit_bytes=_vmem_limit()),
        cost_estimate=pl.CostEstimate(
            flops=4 * E * cap_pad * D * D4,
            transcendentals=E * cap_pad * D4,
            bytes_accessed=2 * 2 * E * D * D4 + 2 * 4 * E * cap_pad * D),
    )(token_idx, h2, w1, w2)


# ----------------------------- routing (plain JAX) -------------------------------

def _route_tokens(logits, top_k, capacity, cap_pad):
    """Top-k routing with per-expert capacity. Returns per-slot token indices & weights."""
    N, E = logits.shape
    _, topk_idx = jax.lax.top_k(logits, top_k)                  # (N, k)
    sel = jax.nn.one_hot(topk_idx, E, dtype=jnp.float32)        # (N, k, E)
    sel_any = jnp.sum(sel, axis=1) > 0                          # (N, E)
    router_probs = jax.nn.softmax(jnp.where(sel_any, logits, _NEG), axis=-1)

    # rank of each (choice, token) pair within its expert: all 1st choices, then 2nd, ...
    selT = jnp.transpose(sel, (1, 0, 2)).reshape(top_k * N, E)
    ranks = jnp.cumsum(selT, axis=0) - 1.0
    rank_pp = jnp.sum(selT * ranks, axis=-1).astype(jnp.int32)          # (k*N,)
    exp_pp = jnp.transpose(topk_idx, (1, 0)).reshape(-1).astype(jnp.int32)
    tok_pp = jnp.tile(jnp.arange(N, dtype=jnp.int32), top_k)

    keep = rank_pp < capacity                                   # drop over-capacity pairs
    w_pp = router_probs[tok_pp, exp_pp] * keep.astype(jnp.float32)
    slot_pp = jnp.where(keep, exp_pp * cap_pad + rank_pp, E * cap_pad)  # dropped -> overflow

    token_idx = jnp.zeros((E * cap_pad + 1,), jnp.int32).at[slot_pp].set(tok_pp)
    slot_w = jnp.zeros((E * cap_pad + 1,), jnp.float32).at[slot_pp].set(w_pp)
    return token_idx[:-1].reshape(E, cap_pad), slot_w[:-1].reshape(E, cap_pad)


def moe_layer(x_resid, h2, logits, noise_logits, params, n_exp, top_k,
              capacity_factor, use_noisy_top_k, noise_key):
    """Returns x_resid + MoE(h2); residual fused into the scatter-add combine."""
    N, D = h2.shape
    capacity = int(math.floor(top_k * capacity_factor * N / n_exp))
    capacity += capacity % 2
    assert capacity > 0
    cap_pad = max(8, ((capacity + 7) // 8) * 8)   # pad slots to a sublane multiple (weight 0)

    if use_noisy_top_k:
        noise = jax.nn.softplus(noise_logits) * jax.random.normal(
            noise_key, noise_logits.shape, jnp.float32)
        logits = logits + noise

    # TODO(synk): top-k / one-hot / cumsum capacity ranking and the weighted scatter-add
    # combine stay in plain JAX (tiny O(N*k*E) element ops); the O(N*k*d) gather/matmul
    # work runs in the Pallas expert kernel.
    token_idx, slot_w = _route_tokens(logits, top_k, capacity, cap_pad)

    exp_out = pallas_expert_mlp(h2, token_idx, params["exp_fc"], params["exp_proj"])

    contrib = exp_out.reshape(n_exp * cap_pad, D) * slot_w.reshape(-1, 1)
    return x_resid.at[token_idx.reshape(-1)].add(contrib)       # combine + residual


# ----------------------------- model glue ----------------------------------------

def init_params(key, d, n_exp):
    ks = jax.random.split(key, 6)
    std = 0.02
    bf = jnp.bfloat16      # all matmul weights stored bf16 (MXU-native, half the HBM bytes)
    return {
        "ln1_g": jnp.ones((d,), jnp.float32),
        "ln1_b": jnp.zeros((d,), jnp.float32),
        "c_attn_w": (std * jax.random.normal(ks[0], (d, 3 * d), jnp.float32)).astype(bf),
        "c_proj_w": (std * jax.random.normal(ks[1], (d, d), jnp.float32)).astype(bf),
        "ln2_g": jnp.ones((d,), jnp.float32),
        "ln2_b": jnp.zeros((d,), jnp.float32),
        "w_g": (std * jax.random.normal(ks[2], (d, n_exp), jnp.float32)).astype(bf),
        "w_noise": (std * jax.random.normal(ks[3], (d, n_exp), jnp.float32)).astype(bf),
        "exp_fc": (std * jax.random.normal(ks[4], (n_exp, d, 4 * d), jnp.float32)).astype(bf),
        "exp_proj": (std * jax.random.normal(ks[5], (n_exp, 4 * d, d), jnp.float32)).astype(bf),
    }


def moe_block_forward(x, params, cfg, noise_key):
    B, T, D = x.shape
    H = cfg["H"]
    N = B * T
    x_flat = x.reshape(N, D)

    # ---- x = x + attn(ln_1(x)) ----   (dropout = identity in eval mode)
    wq, wk, wv = jnp.split(params["c_attn_w"], 3, axis=1)
    q_scale = 1.0 / math.sqrt(D // H)
    q, k, v = fused_ln_qkv(x_flat, params["ln1_g"], params["ln1_b"], wq, wk, wv, q_scale)
    y = pallas_flash_attention(q.reshape(B, T, D), k.reshape(B, T, D),
                               v.reshape(B, T, D), H)
    x1 = fused_matmul_residual(y.reshape(N, D), params["c_proj_w"], x_flat)

    # ---- x = x + moe(ln_2(x)) ----
    h2, logits, noise_logits = fused_ln_router(x1, params["ln2_g"], params["ln2_b"],
                                               params["w_g"], params["w_noise"])
    x2 = moe_layer(x1, h2, logits, noise_logits, params, cfg["n_exp"], cfg["top_k"],
                   cfg["capacity_factor"], cfg["use_noisy_top_k"], noise_key)
    return x2.reshape(B, T, D)


# ----------------------------- main -----------------------------------------------

if __name__ == "__main__":
    d, H, C, n_exp, top_k = 32, 4, 8, 4, 2
    B, T = 2, C
    cfg = dict(H=H, n_exp=n_exp, top_k=top_k,
               capacity_factor=1.25, use_noisy_top_k=True)

    key = jax.random.PRNGKey(0)
    k_param, k_x, k_noise = jax.random.split(key, 3)
    params = init_params(k_param, d, n_exp)
    x = jax.random.normal(k_x, (B, T, d), jnp.float32)

    out = moe_block_forward(x, params, cfg, k_noise)
    out = jax.block_until_ready(out)
    assert out.shape == (B, T, d)
    assert bool(jnp.all(jnp.isfinite(out)))
    print("KERNEL_OK")
</pallas_src>

<mosaic_0001>
module attributes {stable_mosaic.version = 11 : i64} {
  func.func @_ln_qkv_kernel(%arg0: i32, %arg1: i32, %arg2: memref<16x32xf32, #tpu.memory_space<vmem>>, %arg3: memref<1x32xf32, #tpu.memory_space<vmem>>, %arg4: memref<1x32xf32, #tpu.memory_space<vmem>>, %arg5: memref<32x32xbf16, #tpu.memory_space<vmem>>, %arg6: memref<32x32xbf16, #tpu.memory_space<vmem>>, %arg7: memref<32x32xbf16, #tpu.memory_space<vmem>>, %arg8: memref<16x32xbf16, #tpu.memory_space<vmem>>, %arg9: memref<16x32xbf16, #tpu.memory_space<vmem>>, %arg10: memref<16x32xbf16, #tpu.memory_space<vmem>>) attributes {dimension_semantics = [#tpu.dimension_semantics<parallel>, #tpu.dimension_semantics<parallel>], iteration_bounds = array<i64: 1, 1>, scalar_prefetch = 0 : i64, scratch_operands = 0 : i64, tpu.core_type = #tpu.core_type<tc>, window_params = [{transform_indices = @transform_0, window_bounds = array<i64: 16, 32>}, {pipeline_mode = #tpu.pipeline_mode<synchronous>, transform_indices = @transform_1, window_bounds = array<i64: 1, 32>}, {pipeline_mode = #tpu.pipeline_mode<synchronous>, transform_indices = @transform_2, window_bounds = array<i64: 1, 32>}, {transform_indices = @transform_3, window_bounds = array<i64: 32, 32>}, {transform_indices = @transform_4, window_bounds = array<i64: 32, 32>}, {transform_indices = @transform_5, window_bounds = array<i64: 32, 32>}, {transform_indices = @transform_6, window_bounds = array<i64: 16, 32>}, {transform_indices = @transform_7, window_bounds = array<i64: 16, 32>}, {transform_indices = @transform_8, window_bounds = array<i64: 16, 32>}]} {
    %c0 = arith.constant 0 : index
    %c0_0 = arith.constant 0 : index
    %0 = vector.load %arg2[%c0, %c0_0] : memref<16x32xf32, #tpu.memory_space<vmem>>, vector<16x32xf32>
    %cst = arith.constant dense<0.000000e+00> : vector<16xf32>
    %1 = vector.multi_reduction <add>, %0, %cst [1] : vector<16x32xf32> to vector<16xf32>
    %2 = vector.shape_cast %1 : vector<16xf32> to vector<16x1xf32>
    %cst_1 = arith.constant 3.200000e+01 : f32
    %3 = vector.broadcast %cst_1 : f32 to vector<16x1xf32>
    %4 = arith.divf %2, %3 : vector<16x1xf32>
    %5 = vector.broadcast %4 : vector<16x1xf32> to vector<16x32xf32>
    %6 = arith.subf %0, %5 : vector<16x32xf32>
    %7 = arith.mulf %6, %6 : vector<16x32xf32>
    %cst_2 = arith.constant dense<0.000000e+00> : vector<16xf32>
    %8 = vector.multi_reduction <add>, %7, %cst_2 [1] : vector<16x32xf32> to vector<16xf32>
    %9 = vector.shape_cast %8 : vector<16xf32> to vector<16x1xf32>
    %cst_3 = arith.constant 3.200000e+01 : f32
    %10 = vector.broadcast %cst_3 : f32 to vector<16x1xf32>
    %11 = arith.divf %9, %10 : vector<16x1xf32>
    %12 = vector.broadcast %4 : vector<16x1xf32> to vector<16x32xf32>
    %13 = arith.subf %0, %12 : vector<16x32xf32>
    %cst_4 = arith.constant 9.99999974E-6 : f32
    %14 = vector.broadcast %cst_4 : f32 to vector<16x1xf32>
    %15 = arith.addf %11, %14 : vector<16x1xf32>
    %16 = math.rsqrt %15 : vector<16x1xf32>
    %17 = vector.broadcast %16 : vector<16x1xf32> to vector<16x32xf32>
    %18 = arith.mulf %13, %17 : vector<16x32xf32>
    %c0_5 = arith.constant 0 : index
    %c0_6 = arith.constant 0 : index
    %19 = vector.load %arg3[%c0_5, %c0_6] : memref<1x32xf32, #tpu.memory_space<vmem>>, vector<1x32xf32>
    %20 = vector.broadcast %19 : vector<1x32xf32> to vector<16x32xf32>
    %21 = arith.mulf %18, %20 : vector<16x32xf32>
    %c0_7 = arith.constant 0 : index
    %c0_8 = arith.constant 0 : index
    %22 = vector.load %arg4[%c0_7, %c0_8] : memref<1x32xf32, #tpu.memory_space<vmem>>, vector<1x32xf32>
    %23 = vector.broadcast %22 : vector<1x32xf32> to vector<16x32xf32>
    %24 = arith.addf %21, %23 : vector<16x32xf32>
    %25 = arith.truncf %24 : vector<16x32xf32> to vector<16x32xbf16>
    %c0_9 = arith.constant 0 : index
    %c0_10 = arith.constant 0 : index
    %26 = vector.load %arg5[%c0_9, %c0_10] : memref<32x32xbf16, #tpu.memory_space<vmem>>, vector<32x32xbf16>
    %cst_11 = arith.constant dense<0.000000e+00> : vector<16x32xf32>
    %27 = tpu.matmul %25, %26, %cst_11 {dimension_numbers = #tpu.dot_dimension_numbers<[1], [0], [0], [1], [0, 0, 1, 1], [], []>} : vector<16x32xbf16>, vector<32x32xbf16>, vector<16x32xf32> -> vector<16x32xf32>
    %cst_12 = arith.constant 0.353553385 : f32
    %28 = vector.broadcast %cst_12 : f32 to vector<16x32xf32>
    %29 = arith.mulf %27, %28 : vector<16x32xf32>
    %30 = arith.truncf %29 : vector<16x32xf32> to vector<16x32xbf16>
    %c0_13 = arith.constant 0 : index
    %c0_14 = arith.constant 0 : index
    %31 = vector.load %arg8[%c0_13, %c0_14] : memref<16x32xbf16, #tpu.memory_space<vmem>>, vector<16x32xbf16>
    tpu.vector_store %arg8[%c0_13, %c0_14], %30 {strides = array<i32>} : memref<16x32xbf16, #tpu.memory_space<vmem>>, vector<16x32xbf16>,
    %c0_15 = arith.constant 0 : index
    %c0_16 = arith.constant 0 : index
    %32 = vector.load %arg6[%c0_15, %c0_16] : memref<32x32xbf16, #tpu.memory_space<vmem>>, vector<32x32xbf16>
    %cst_17 = arith.constant dense<0.000000e+00> : vector<16x32xf32>
    %33 = tpu.matmul %25, %32, %cst_17 {dimension_numbers = #tpu.dot_dimension_numbers<[1], [0], [0], [1], [0, 0, 1, 1], [], []>} : vector<16x32xbf16>, vector<32x32xbf16>, vector<16x32xf32> -> vector<16x32xf32>
    %34 = arith.truncf %33 : vector<16x32xf32> to vector<16x32xbf16>
    %c0_18 = arith.constant 0 : index
    %c0_19 = arith.constant 0 : index
    %35 = vector.load %arg9[%c0_18, %c0_19] : memref<16x32xbf16, #tpu.memory_space<vmem>>, vector<16x32xbf16>
    tpu.vector_store %arg9[%c0_18, %c0_19], %34 {strides = array<i32>} : memref<16x32xbf16, #tpu.memory_space<vmem>>, vector<16x32xbf16>,
    %c0_20 = arith.constant 0 : index
    %c0_21 = arith.constant 0 : index
    %36 = vector.load %arg7[%c0_20, %c0_21] : memref<32x32xbf16, #tpu.memory_space<vmem>>, vector<32x32xbf16>
    %cst_22 = arith.constant dense<0.000000e+00> : vector<16x32xf32>
    %37 = tpu.matmul %25, %36, %cst_22 {dimension_numbers = #tpu.dot_dimension_numbers<[1], [0], [0], [1], [0, 0, 1, 1], [], []>} : vector<16x32xbf16>, vector<32x32xbf16>, vector<16x32xf32> -> vector<16x32xf32>
    %38 = arith.truncf %37 : vector<16x32xf32> to vector<16x32xbf16>
    %c0_23 = arith.constant 0 : index
    %c0_24 = arith.constant 0 : index
    %39 = vector.load %arg10[%c0_23, %c0_24] : memref<16x32xbf16, #tpu.memory_space<vmem>>, vector<16x32xbf16>
    tpu.vector_store %arg10[%c0_23, %c0_24], %38 {strides = array<i32>} : memref<16x32xbf16, #tpu.memory_space<vmem>>, vector<16x32xbf16>,
    return
  }
  func.func @transform_0(%arg0: i32, %arg1: i32) -> (i32, i32) {
    %c0_i32 = arith.constant 0 : i32
    %c0_i32_0 = arith.constant 0 : i32
    return %arg0, %c0_i32 : i32, i32
  }
  func.func @transform_1(%arg0: i32, %arg1: i32) -> (i32, i32) {
    %c0_i32 = arith.constant 0 : i32
    %c0_i32_0 = arith.constant 0 : i32
    %c0_i32_1 = arith.constant 0 : i32
    return %c0_i32, %c0_i32_0 : i32, i32
  }
  func.func @transform_2(%arg0: i32, %arg1: i32) -> (i32, i32) {
    %c0_i32 = arith.constant 0 : i32
    %c0_i32_0 = arith.constant 0 : i32
    %c0_i32_1 = arith.constant 0 : i32
    return %c0_i32, %c0_i32_0 : i32, i32
  }
  func.func @transform_3(%arg0: i32, %arg1: i32) -> (i32, i32) {
    %c0_i32 = arith.constant 0 : i32
    %c0_i32_0 = arith.constant 0 : i32
    return %c0_i32, %arg1 : i32, i32
  }
  func.func @transform_4(%arg0: i32, %arg1: i32) -> (i32, i32) {
    %c0_i32 = arith.constant 0 : i32
    %c0_i32_0 = arith.constant 0 : i32
    return %c0_i32, %arg1 : i32, i32
  }
  func.func @transform_5(%arg0: i32, %arg1: i32) -> (i32, i32) {
    %c0_i32 = arith.constant 0 : i32
    %c0_i32_0 = arith.constant 0 : i32
    return %c0_i32, %arg1 : i32, i32
  }
  func.func @transform_6(%arg0: i32, %arg1: i32) -> (i32, i32) {
    %c0_i32 = arith.constant 0 : i32
    return %arg0, %arg1 : i32, i32
  }
  func.func @transform_7(%arg0: i32, %arg1: i32) -> (i32, i32) {
    %c0_i32 = arith.constant 0 : i32
    return %arg0, %arg1 : i32, i32
  }
  func.func @transform_8(%arg0: i32, %arg1: i32) -> (i32, i32) {
    %c0_i32 = arith.constant 0 : i32
    return %arg0, %arg1 : i32, i32
  }
}

</mosaic_0001>

<llo_original>
// kernel: tpu_custom_call.1
$region0: #{tpu_custom_call.1}
  #allocation0 [shape = 'u32[]', space=smem, size = 0x4, offset = 0x4, fixed_abs, tag = 'smem constant byte address 0x4 - core index']
  #allocation1 [shape = 'u32[144,128]{1,0:T(1,128)}', space=vmem, size = 0x12000, scoped, tag = 'internal scratch']
  %s0 = inlined_call_operand.hbm [shape: f32[16,32], index: 0, kind: input, shape index: {}]
  %s1 = inlined_call_operand.vmem [shape: f32[1,32], index: 1, kind: input, shape index: {}]
  %s2 = inlined_call_operand.vmem [shape: f32[1,32], index: 2, kind: input, shape index: {}]
  %s3 = inlined_call_operand.hbm [shape: bf16[32,32], index: 3, kind: input, shape index: {}]
  %s4 = inlined_call_operand.hbm [shape: bf16[32,32], index: 4, kind: input, shape index: {}]
  %s5 = inlined_call_operand.hbm [shape: bf16[32,32], index: 5, kind: input, shape index: {}]
  %s6 = inlined_call_operand.hbm [shape: bf16[16,32], index: 6, kind: output, shape index: {0}]
  %s7 = inlined_call_operand.hbm [shape: bf16[16,32], index: 7, kind: output, shape index: {1}]
  %s8 = inlined_call_operand.hbm [shape: bf16[16,32], index: 8, kind: output, shape index: {2}]
  %9 = xla_tuple %s6, %s7, %s8
  %s10 = sld [smem:[#allocation0]]
  $region66: #{tpu_custom_call.1} parent=0
    _
  %s12 = ssub.s32 1, %s10
  %s13 = scalar_select 0, %s12, %s10
  $region1: #{tpu_custom_call.1} parent=0
    #allocation2 [shape = 'u8[8192]{0}', space=vmem, size = 0x2000, scoped, tag = 'input window, operand 0, single buffered']
    #allocation3 [shape = 's32[1]{0}', space=sflag, size = 0x4, scoped, tag = 'scoped memory for tpu_custom_call.1']
    #allocation4 [shape = 's32[1]{0}', space=sflag, size = 0x4, scoped, tag = 'scoped memory for tpu_custom_call.1']
    #allocation5 [shape = 'u8[8192]{0}', space=vmem, size = 0x2000, scoped, tag = 'input window, operand 3, single buffered']
    #allocation6 [shape = 's32[1]{0}', space=sflag, size = 0x4, scoped, tag = 'scoped memory for tpu_custom_call.1']
    #allocation7 [shape = 'u8[8192]{0}', space=vmem, size = 0x2000, scoped, tag = 'input window, operand 4, single buffered']
    #allocation8 [shape = 'u8[8192]{0}', space=vmem, size = 0x2000, scoped, tag = 'input window, operand 5, single buffered']
    #allocation9 [shape = 's32[1]{0}', space=sflag, size = 0x4, scoped, tag = 'scoped memory for tpu_custom_call.1']
    #allocation10 [shape = 'u8[4096]{0}', space=vmem, size = 0x1000, scoped, tag = 'output window, operand 0, single buffered']
    #allocation11 [shape = 'u8[4096]{0}', space=vmem, size = 0x1000, scoped, tag = 'output window, operand 1, single buffered']
    #allocation12 [shape = 's32[1]{0}', space=sflag, size = 0x4, scoped, tag = 'scoped memory for tpu_custom_call.1']
    #allocation13 [shape = 'u8[4096]{0}', space=vmem, size = 0x1000, scoped, tag = 'output window, operand 2, single buffered']
    %14 = vsyncpa [#allocation3], 0
    %15 = vsyncpa [#allocation6], 0
    %16 = vsyncpa [#allocation9], 0
    %17 = vsyncpa [#allocation4], 0
    %18 = vsyncpa [#allocation12], 0
    // Predicated region
    $region2: #{tpu_custom_call.1} parent=1 // pred_check
      _
    $region3: #{tpu_custom_call.1} parent=1 // pred_check_branch
      %20 = sbr.rel (0) target = $region5
    $region4: #{tpu_custom_call.1} parent=1 // pred_region
      %s22 = ssub.s32 256, 256
      %23 = vsyncadd [#allocation3], %s22
      %s24 = sshll.u32 [#allocation2], 4
      %s25 = int_to_ptr.vmem [resolvable:$true] %s24
      %30 = dma.hbm_to_vmem [thread:$0]  %s0, 256, %s25, [#allocation3], 128, 128, 8
    $region5: #{tpu_custom_call.1} parent=1 // pred_fallthru
      _
    // Predicated region
    $region6: #{tpu_custom_call.1} parent=1 // pred_check
      _
    $region7: #{tpu_custom_call.1} parent=1 // pred_check_branch
      %32 = sbr.rel (0) target = $region9
    $region8: #{tpu_custom_call.1} parent=1 // pred_region
      _
    $region9: #{tpu_custom_call.1} parent=1 // pred_fallthru
      _
    // Predicated region
    $region10: #{tpu_custom_call.1} parent=1 // pred_check
      _
    $region11: #{tpu_custom_call.1} parent=1 // pred_check_branch
      %34 = sbr.rel (0) target = $region13
    $region12: #{tpu_custom_call.1} parent=1 // pred_region
      _
    $region13: #{tpu_custom_call.1} parent=1 // pred_fallthru
      _
    // Predicated region
    $region14: #{tpu_custom_call.1} parent=1 // pred_check
      _
    $region15: #{tpu_custom_call.1} parent=1 // pred_check_branch
      %36 = sbr.rel (0) target = $region17
    $region16: #{tpu_custom_call.1} parent=1 // pred_region
      %s38 = ssub.s32 256, 256
      %39 = vsyncadd [#allocation6], %s38
      %s40 = sshll.u32 [#allocation5], 4
      %s41 = int_to_ptr.vmem [resolvable:$true] %s40
      %46 = dma.hbm_to_vmem [thread:$0]  %s3, 256, %s41, [#allocation6], 64, 64, 4
    $region17: #{tpu_custom_call.1} parent=1 // pred_fallthru
      _
    // Predicated region
    $region18: #{tpu_custom_call.1} parent=1 // pred_check
      _
    $region19: #{tpu_custom_call.1} parent=1 // pred_check_branch
      %48 = sbr.rel (0) target = $region21
    $region20: #{tpu_custom_call.1} parent=1 // pred_region
      %s50 = ssub.s32 256, 256
      %51 = vsyncadd [#allocation6], %s50
      %s52 = sshll.u32 [#allocation7], 4
      %s53 = int_to_ptr.vmem [resolvable:$true] %s52
      %58 = dma.hbm_to_vmem [thread:$0]  %s4, 256, %s53, [#allocation6], 64, 64, 4
    $region21: #{tpu_custom_call.1} parent=1 // pred_fallthru
      _
    // Predicated region
    $region22: #{tpu_custom_call.1} parent=1 // pred_check
      _
    $region23: #{tpu_custom_call.1} parent=1 // pred_check_branch
      %60 = sbr.rel (0) target = $region25
    $region24: #{tpu_custom_call.1} parent=1 // pred_region
      %s62 = ssub.s32 256, 256
      %63 = vsyncadd [#allocation9], %s62
      %s64 = sshll.u32 [#allocation8], 4
      %s65 = int_to_ptr.vmem [resolvable:$true] %s64
      %70 = dma.hbm_to_vmem [thread:$0]  %s5, 256, %s65, [#allocation9], 64, 64, 4
    $region25: #{tpu_custom_call.1} parent=1 // pred_fallthru
      _
    // Predicated region
    $region26: #{tpu_custom_call.1} parent=1 // pred_check
      _
    $region27: #{tpu_custom_call.1} parent=1 // pred_check_branch
      %72 = sbr.rel (0) target = $region29
    $region28: #{tpu_custom_call.1} parent=1 // pred_region
      %73 = dma.done [#allocation3], 256
    $region29: #{tpu_custom_call.1} parent=1 // pred_fallthru
      _
    // Predicated region
    $region30: #{tpu_custom_call.1} parent=1 // pred_check
      _
    $region31: #{tpu_custom_call.1} parent=1 // pred_check_branch
      %75 = sbr.rel (0) target = $region33
    $region32: #{tpu_custom_call.1} parent=1 // pred_region
      %76 = dma.done [#allocation6], 256
    $region33: #{tpu_custom_call.1} parent=1 // pred_fallthru
      _
    // Predicated region
    $region34: #{tpu_custom_call.1} parent=1 // pred_check
      _
    $region35: #{tpu_custom_call.1} parent=1 // pred_check_branch
      %78 = sbr.rel (0) target = $region37
    $region36: #{tpu_custom_call.1} parent=1 // pred_region
      %79 = dma.done [#allocation6], 256
    $region37: #{tpu_custom_call.1} parent=1 // pred_fallthru
      _
    // Predicated region
    $region38: #{tpu_custom_call.1} parent=1 // pred_check
      _
    $region39: #{tpu_custom_call.1} parent=1 // pred_check_branch
      %81 = sbr.rel (0) target = $region41
    $region40: #{tpu_custom_call.1} parent=1 // pred_region
      %82 = dma.done [#allocation9], 256
    $region41: #{tpu_custom_call.1} parent=1 // pred_fallthru
      _
    %v84 = vld [vmem:[#allocation2] sm:$0xff]
    %v85 = vld [vmem:[#allocation2 + $0x8] sm:$0xff]
    %vm86 = vcmask 261120
    %v87 = vsel %vm86, %v84, 0.0
    %88 = vadd.xlane.f32.xlu0 %v87
    %v89 = vpop.xlane.xlu0 %88
    %v90 = vsel %vm86, %v85, 0.0
    %91 = vadd.xlane.f32.xlu0 %v90
    %v92 = vpop.xlane.xlu0 %91
    %v93 = vrcp.pop 32.0
    %v94 = vmul.f32 %v89, %v93
    %v95 = vmul.f32 %v92, %v93
    %v96 = vsub.f32 %v84, %v94
    %v97 = vsub.f32 %v85, %v95
    %v98 = vmul.f32 %v96, %v96
    %v99 = vmul.f32 %v97, %v97
    %v100 = vsel %vm86, %v98, 0.0
    %101 = vadd.xlane.f32.xlu0 %v100
    %v102 = vpop.xlane.xlu0 %101
    %v103 = vsel %vm86, %v99, 0.0
    %104 = vadd.xlane.f32.xlu0 %v103
    %v105 = vpop.xlane.xlu0 %104
    %v106 = vmul.f32 %v102, %v93
    %v107 = vmul.f32 %v105, %v93
    %v108 = vadd.f32 %v106, 1e-05
    %v109 = vadd.f32 %v107, 1e-05
    %v110 = vrsqrt.pop %v108
    %v111 = vrsqrt.pop %v109
    %v112 = vmul.f32 %v96, %v110
    %v113 = vmul.f32 %v97, %v111
    %v114 = vld [vmem:[%s1] sm:$0x1]
    %v116 = vlaneseq
    %v117 = vshrl.u32 %v116, 7
    %v118 = vsub.s32 0, %v117
    %v119 = vrot.slane %v114, %v118
    %v121 = vmul.f32 %v112, %v119
    %v122 = vmul.f32 %v113, %v119
    %v123 = vld [vmem:[%s2] sm:$0x1]
    %v125 = vlaneseq
    %v126 = vshrl.u32 %v125, 7
    %v127 = vsub.s32 0, %v126
    %v128 = vrot.slane %v123, %v127
    %v130 = vadd.f32 %v121, %v128
    %v131 = vadd.f32 %v122, %v128
    %v132 = vpack.c.bf16 %v131, %v130
    %v133 = vld [vmem:[#allocation5] sm:$0xf]
    %v134 = vld [vmem:[#allocation5 + $0x4] sm:$0xf]
    %v135 = vld [vmem:[#allocation5 + $0x8] sm:$0xf]
    %v136 = vld [vmem:[#allocation5 + $0xc] sm:$0xf]
    %v141 = vunpack.c.l.b16 %v133
    %v142 = vunpack.c.l.b16 %v134
    %v143 = vunpack.c.l.b16 %v135
    %v144 = vunpack.c.l.b16 %v136
    %v145 = vpack.c.b16 %v142, %v141
    %v146 = vpack.c.b16 %v144, %v143
    %v150 = vsel %vm86, %v132, 0
    %152 = vmatprep.subr.bf16.mxu0 0
    %153 = vmatpush1.bf16.msra.mxu0 0
    %154 = vmatprep.subr.bf16.mxu0 0
    %155 = vmatpush1.bf16.msra.mxu0 0
    %156 = vmatprep.subr.bf16.mxu0 0
    %157 = vmatpush1.bf16.msra.mxu0 0
    %158 = vmatprep.subr.bf16.mxu0 0
    %159 = vmatpush1.bf16.msra.mxu0 0
    %160 = vmatprep.subr.bf16.mxu0 0
    %161 = vmatpush1.bf16.msra.mxu0 0
    %162 = vmatprep.subr.bf16.mxu0 0
    %163 = vmatpush1.bf16.msra.mxu0 0
    %164 = vmatprep.subr.bf16.mxu0 0
    %165 = vmatpush1.bf16.msra.mxu0 %v146
    %166 = vmatprep.subr.bf16.mxu0 0
    %167 = vmatpush1.bf16.msra.mxu0 %v145
    %168 = vmatprep.subr.bf16.mxu0 0
    %169 = vmatpush2.bf16.msra.mxu0 0
    %170 = vmatprep.subr.bf16.mxu0 0
    %171 = vmatpush2.bf16.msra.mxu0 0
    %172 = vmatprep.subr.bf16.mxu0 0
    %173 = vmatpush2.bf16.msra.mxu0 0
    %174 = vmatprep.subr.bf16.mxu0 0
    %175 = vmatpush2.bf16.msra.mxu0 0
    %176 = vmatprep.subr.bf16.mxu0 0
    %177 = vmatpush2.bf16.msra.mxu0 0
    %178 = vmatprep.subr.bf16.mxu0 0
    %179 = vmatpush2.bf16.msra.mxu0 0
    %180 = vmatprep.subr.bf16.mxu0 0
    %181 = vmatpush2.bf16.msra.mxu0 0
    %182 = vmatprep.subr.bf16.mxu0 0
    %183 = vmatpush2.bf16.msra.mxu0 0
    %184 = vmatprep.mubr.bf16.mxu0 0
    %185 = vmatmul.mubr.bf16.gmra.mxu0 %v150
    %v186 = vpop.f32.mrf.mxu0
    %v187 = vadd.f32 0.0, %v186
    %v188 = vpop.f32.mrf.mxu0
    %v189 = vpop.f32.mrf.mxu0
    %v190 = vadd.f32 0.0, %v189
    %v191 = vpop.f32.mrf.mxu0
    %192 = vdwg.mxu0
    %v193 = vmul.f32 %v187, 0.35355338
    %v194 = vmul.f32 %v190, 0.35355338
    %v195 = vpack.c.bf16 %v194, %v193
    %v197 = vunpack.c.l.b16 %v195
    %v198 = vunpack.c.h.b16 %v195
    %v199 = vpack.c.b16 %v197, %v197
    %v200 = vpack.c.b16 %v198, %v198
    %vm203 = vcmask 257024
    %204 = vst.msk [vmem:[#allocation10] sm:$0xf] %vm203, %v199
    %205 = vst.msk [vmem:[#allocation10 + $0x4] sm:$0xf] %vm203, %v200
    %v206 = vld [vmem:[#allocation7] sm:$0xf]
    %v207 = vld [vmem:[#allocation7 + $0x4] sm:$0xf]
    %v208 = vld [vmem:[#allocation7 + $0x8] sm:$0xf]
    %v209 = vld [vmem:[#allocation7 + $0xc] sm:$0xf]
    %v214 = vunpack.c.l.b16 %v206
    %v215 = vunpack.c.l.b16 %v207
    %v216 = vunpack.c.l.b16 %v208
    %v217 = vunpack.c.l.b16 %v209
    %v218 = vpack.c.b16 %v215, %v214
    %v219 = vpack.c.b16 %v217, %v216
    %222 = vmatprep.subr.bf16.mxu0 0
    %223 = vmatpush1.bf16.msra.mxu0 0
    %224 = vmatprep.subr.bf16.mxu0 0
    %225 = vmatpush1.bf16.msra.mxu0 0
    %226 = vmatprep.subr.bf16.mxu0 0
    %227 = vmatpush1.bf16.msra.mxu0 0
    %228 = vmatprep.subr.bf16.mxu0 0
    %229 = vmatpush1.bf16.msra.mxu0 0
    %230 = vmatprep.subr.bf16.mxu0 0
    %231 = vmatpush1.bf16.msra.mxu0 0
    %232 = vmatprep.subr.bf16.mxu0 0
    %233 = vmatpush1.bf16.msra.mxu0 0
    %234 = vmatprep.subr.bf16.mxu0 0
    %235 = vmatpush1.bf16.msra.mxu0 %v219
    %236 = vmatprep.subr.bf16.mxu0 0
    %237 = vmatpush1.bf16.msra.mxu0 %v218
    %238 = vmatprep.subr.bf16.mxu0 0
    %239 = vmatpush2.bf16.msra.mxu0 0
    %240 = vmatprep.subr.bf16.mxu0 0
    %241 = vmatpush2.bf16.msra.mxu0 0
    %242 = vmatprep.subr.bf16.mxu0 0
    %243 = vmatpush2.bf16.msra.mxu0 0
    %244 = vmatprep.subr.bf16.mxu0 0
    %245 = vmatpush2.bf16.msra.mxu0 0
    %246 = vmatprep.subr.bf16.mxu0 0
    %247 = vmatpush2.bf16.msra.mxu0 0
    %248 = vmatprep.subr.bf16.mxu0 0
    %249 = vmatpush2.bf16.msra.mxu0 0
    %250 = vmatprep.subr.bf16.mxu0 0
    %251 = vmatpush2.bf16.msra.mxu0 0
    %252 = vmatprep.subr.bf16.mxu0 0
    %253 = vmatpush2.bf16.msra.mxu0 0
    %254 = vmatprep.mubr.bf16.mxu0 0
    %255 = vmatmul.mubr.bf16.gmra.mxu0 %v150
    %v256 = vpop.f32.mrf.mxu0
    %v257 = vadd.f32 0.0, %v256
    %v258 = vpop.f32.mrf.mxu0
    %v259 = vpop.f32.mrf.mxu0
    %v260 = vadd.f32 0.0, %v259
    %v261 = vpop.f32.mrf.mxu0
    %262 = vdwg.mxu0
    %v263 = vpack.c.bf16 %v260, %v257
    %v265 = vunpack.c.l.b16 %v263
    %v266 = vunpack.c.h.b16 %v263
    %v267 = vpack.c.b16 %v265, %v265
    %v268 = vpack.c.b16 %v266, %v266
    %271 = vst.msk [vmem:[#allocation11] sm:$0xf] %vm203, %v267
    %272 = vst.msk [vmem:[#allocation11 + $0x4] sm:$0xf] %vm203, %v268
    %v273 = vld [vmem:[#allocation8] sm:$0xf]
    %v274 = vld [vmem:[#allocation8 + $0x4] sm:$0xf]
    %v275 = vld [vmem:[#allocation8 + $0x8] sm:$0xf]
    %v276 = vld [vmem:[#allocation8 + $0xc] sm:$0xf]
    %v281 = vunpack.c.l.b16 %v273
    %v282 = vunpack.c.l.b16 %v274
    %v283 = vunpack.c.l.b16 %v275
    %v284 = vunpack.c.l.b16 %v276
    %v285 = vpack.c.b16 %v282, %v281
    %v286 = vpack.c.b16 %v284, %v283
    %289 = vmatprep.subr.bf16.mxu0 0
    %290 = vmatpush1.bf16.msra.mxu0 0
    %291 = vmatprep.subr.bf16.mxu0 0
    %292 = vmatpush1.bf16.msra.mxu0 0
    %293 = vmatprep.subr.bf16.mxu0 0
    %294 = vmatpush1.bf16.msra.mxu0 0
    %295 = vmatprep.subr.bf16.mxu0 0
    %296 = vmatpush1.bf16.msra.mxu0 0
    %297 = vmatprep.subr.bf16.mxu0 0
    %298 = vmatpush1.bf16.msra.mxu0 0
    %299 = vmatprep.subr.bf16.mxu0 0
    %300 = vmatpush1.bf16.msra.mxu0 0
    %301 = vmatprep.subr.bf16.mxu0 0
    %302 = vmatpush1.bf16.msra.mxu0 %v286
    %303 = vmatprep.subr.bf16.mxu0 0
    %304 = vmatpush1.bf16.msra.mxu0 %v285
    %305 = vmatprep.subr.bf16.mxu0 0
    %306 = vmatpush2.bf16.msra.mxu0 0
    %307 = vmatprep.subr.bf16.mxu0 0
    %308 = vmatpush2.bf16.msra.mxu0 0
    %309 = vmatprep.subr.bf16.mxu0 0
    %310 = vmatpush2.bf16.msra.mxu0 0
    %311 = vmatprep.subr.bf16.mxu0 0
    %312 = vmatpush2.bf16.msra.mxu0 0
    %313 = vmatprep.subr.bf16.mxu0 0
    %314 = vmatpush2.bf16.msra.mxu0 0
    %315 = vmatprep.subr.bf16.mxu0 0
    %316 = vmatpush2.bf16.msra.mxu0 0
    %317 = vmatprep.subr.bf16.mxu0 0
    %318 = vmatpush2.bf16.msra.mxu0 0
    %319 = vmatprep.subr.bf16.mxu0 0
    %320 = vmatpush2.bf16.msra.mxu0 0
    %321 = vmatprep.mubr.bf16.mxu0 0
    %322 = vmatmul.mubr.bf16.gmra.mxu0 %v150
    %v323 = vpop.f32.mrf.mxu0
    %v324 = vadd.f32 0.0, %v323
    %v325 = vpop.f32.mrf.mxu0
    %v326 = vpop.f32.mrf.mxu0
    %v327 = vadd.f32 0.0, %v326
    %v328 = vpop.f32.mrf.mxu0
    %329 = vdwg.mxu0
    %v330 = vpack.c.bf16 %v327, %v324
    %v332 = vunpack.c.l.b16 %v330
    %v333 = vunpack.c.h.b16 %v330
    %v334 = vpack.c.b16 %v332, %v332
    %v335 = vpack.c.b16 %v333, %v333
    %338 = vst.msk [vmem:[#allocation13] sm:$0xf] %vm203, %v334
    %339 = vst.msk [vmem:[#allocation13 + $0x4] sm:$0xf] %vm203, %v335
    // Predicated region
    $region42: #{tpu_custom_call.1} parent=1 // pred_check
      _
    $region43: #{tpu_custom_call.1} parent=1 // pred_check_branch
      %341 = sbr.rel (0) target = $region45
    $region44: #{tpu_custom_call.1} parent=1 // pred_region
      %s343 = ssub.s32 128, 128
      %344 = vsyncadd [#allocation4], %s343
      %s345 = sshll.u32 [#allocation10], 4
      %s346 = int_to_ptr.vmem [resolvable:$true] %s345
      %351 = dma.vmem_to_hbm [thread:$0]  %s346, 128, %s6, [#allocation4], 64, 64, 4
    $region45: #{tpu_custom_call.1} parent=1 // pred_fallthru
      _
    // Predicated region
    $region46: #{tpu_custom_call.1} parent=1 // pred_check
      _
    $region47: #{tpu_custom_call.1} parent=1 // pred_check_branch
      %353 = sbr.rel (0) target = $region49
    $region48: #{tpu_custom_call.1} parent=1 // pred_region
      %s355 = ssub.s32 128, 128
      %356 = vsyncadd [#allocation12], %s355
      %s357 = sshll.u32 [#allocation11], 4
      %s358 = int_to_ptr.vmem [resolvable:$true] %s357
      %363 = dma.vmem_to_hbm [thread:$0]  %s358, 128, %s7, [#allocation12], 64, 64, 4
    $region49: #{tpu_custom_call.1} parent=1 // pred_fallthru
      _
    // Predicated region
    $region50: #{tpu_custom_call.1} parent=1 // pred_check
      _
    $region51: #{tpu_custom_call.1} parent=1 // pred_check_branch
      %365 = sbr.rel (0) target = $region53
    $region52: #{tpu_custom_call.1} parent=1 // pred_region
      %s367 = ssub.s32 128, 128
      %368 = vsyncadd [#allocation12], %s367
      %s369 = sshll.u32 [#allocation13], 4
      %s370 = int_to_ptr.vmem [resolvable:$true] %s369
      %375 = dma.vmem_to_hbm [thread:$0]  %s370, 128, %s8, [#allocation12], 64, 64, 4
    $region53: #{tpu_custom_call.1} parent=1 // pred_fallthru
      _
    // Predicated region
    $region54: #{tpu_custom_call.1} parent=1 // pred_check
      _
    $region55: #{tpu_custom_call.1} parent=1 // pred_check_branch
      %377 = sbr.rel (0) target = $region57
    $region56: #{tpu_custom_call.1} parent=1 // pred_region
      %378 = dma.done [#allocation4], 128
    $region57: #{tpu_custom_call.1} parent=1 // pred_fallthru
      _
    // Predicated region
    $region58: #{tpu_custom_call.1} parent=1 // pred_check
      _
    $region59: #{tpu_custom_call.1} parent=1 // pred_check_branch
      %380 = sbr.rel (0) target = $region61
    $region60: #{tpu_custom_call.1} parent=1 // pred_region
      %381 = dma.done [#allocation12], 128
    $region61: #{tpu_custom_call.1} parent=1 // pred_fallthru
      _
    // Predicated region
    $region62: #{tpu_custom_call.1} parent=1 // pred_check
      _
    $region63: #{tpu_custom_call.1} parent=1 // pred_check_branch
      %383 = sbr.rel (0) target = $region65
    $region64: #{tpu_custom_call.1} parent=1 // pred_region
      %384 = dma.done [#allocation12], 128
    $region65: #{tpu_custom_call.1} parent=1 // pred_fallthru
      _
    %385 = vsyncpa [#allocation3], 1
    %386 = vsyncpa [#allocation6], 1
    %387 = vsyncpa [#allocation9], 1
    %388 = vsyncpa [#allocation4], 1
    %389 = vsyncpa [#allocation12], 1

</llo_original>
